<compile_context>
chip_gen: v7x
topology: tpu7x:2x2x1
jax: 0.10.0
libtpu: 0.0.40
codegen_flags: <defaults>
</compile_context>

<pallas_src>
import math

import jax
import jax.numpy as jnp
from jax.experimental import pallas as pl
from jax.experimental.pallas import tpu as pltpu

K = 5
STRIDE = 2
PADDING = 2
OUTPUT_PADDING = 1


def _deconv_subpixel_kernel(x_ref, w_ref, b_ref, o_ref):
    # x_ref: (1, H+2, W+2, Cin)   zero-halo-padded NHWC input (full sample), fp32
    # w_ref: (9*Cin, 4*Cout)      sub-pixel tap-fused weights, bf16
    # b_ref: (1, 4*Cout)          bias tiled over the 4 phases, fp32
    # o_ref: (1, th, W, 4*Cout)   phase-packed output row-tile
    _, th, wd, _ = o_ref.shape

    t = pl.program_id(1)
    r0 = pl.multiple_of(t * th, th)

    # Padded input rows [r0, r0+th+2) feed output rows [2*r0, 2*(r0+th)).
    x = x_ref[0, pl.ds(r0, th + 2), :, :]          # (th+2, W+2, Cin)
    # ReLU precedes the deconv in the module; halo zeros are ReLU-invariant.
    x = jnp.maximum(x, 0.0)

    # im2col over the 3x3 sub-pixel tap window -> (th, W, 9*Cin)
    cols = []
    for a in range(3):
        for b in range(3):
            cols.append(x[a:a + th, b:b + wd, :])
    patch = jnp.concatenate(cols, axis=-1).astype(jnp.bfloat16)

    # Single fused MXU contraction for all taps and all 4 output phases.
    acc = jax.lax.dot_general(
        patch, w_ref[...],
        dimension_numbers=(((2,), (0,)), ((), ())),
        preferred_element_type=jnp.float32)         # (th, W, 4*Cout) fp32
    acc = acc + b_ref[...]                           # (1, 4*Cout) broadcast
    o_ref[...] = acc[None].astype(o_ref.dtype)


def _subpixel_weights(weight):
    """(Cin, Cout, K, K) ConvTranspose2d weight -> (9*Cin, 4*Cout) bf16.

    Row index  = (a*3 + b)*Cin + ci   for tap offset (a, b) in the 3x3 window
                                      of the 1-px-padded input.
    Col index  = (2*ph + pw)*Cout + co  for output phase (oh%2, ow%2).
    Taps a kernel position never reaches for a phase are zero (free on the MXU).
    """
    cin, cout, kh_dim, kw_dim = weight.shape
    w = weight.astype(jnp.float32)
    zeros = jnp.zeros((cin, cout), jnp.float32)
    rows = []
    for a in range(3):
        for b in range(3):
            phase_slabs = []
            for ph in range(2):
                kh = 4 - 2 * a if ph == 0 else 5 - 2 * a
                for pw in range(2):
                    kw_ = 4 - 2 * b if pw == 0 else 5 - 2 * b
                    if 0 <= kh < kh_dim and 0 <= kw_ < kw_dim:
                        phase_slabs.append(w[:, :, kh, kw_])
                    else:
                        phase_slabs.append(zeros)
            rows.append(jnp.stack(phase_slabs, axis=1))   # (cin, 4, cout)
    w_taps = jnp.stack(rows, axis=0)                      # (9, cin, 4, cout)
    return w_taps.reshape(9 * cin, 4 * cout).astype(jnp.bfloat16)


def deconvblock_forward(x_nchw, weight, bias):
    """Deconvblock forward (normalization='none', dropout identity at inference).

    x_nchw: (N, Cin, H, W) float32
    weight: (Cin, Cout, K, K)  -- PyTorch ConvTranspose2d weight layout
    bias:   (Cout,)
    returns (N, Cout, 2H, 2W)
    """
    n, cin, h, w = x_nchw.shape
    cout = weight.shape[1]

    th = math.gcd(h, 8)          # input rows per tile (2*th output rows)
    rt = h // th

    # NHWC + 1-pixel zero halo (no dilated intermediate, no strided scatter).
    x_nhwc = jnp.transpose(x_nchw, (0, 2, 3, 1))
    x_pad = jnp.pad(x_nhwc, ((0, 0), (1, 1), (1, 1), (0, 0)))

    w_mat = _subpixel_weights(weight)                               # (9*Cin, 4*Cout) bf16
    b4 = jnp.tile(bias.astype(jnp.float32), 4).reshape(1, 4 * cout)  # (1, 4*Cout) fp32

    out_phased = pl.pallas_call(
        _deconv_subpixel_kernel,
        out_shape=jax.ShapeDtypeStruct((n, h, w, 4 * cout), x_nchw.dtype),
        grid_spec=pltpu.PrefetchScalarGridSpec(
            num_scalar_prefetch=0,
            grid=(n, rt),
            in_specs=[
                # full padded sample stays resident across the row-tile axis
                pl.BlockSpec((1, h + 2, w + 2, cin), lambda i, t: (i, 0, 0, 0)),
                pl.BlockSpec((9 * cin, 4 * cout), lambda i, t: (0, 0)),
                pl.BlockSpec((1, 4 * cout), lambda i, t: (0, 0)),
            ],
            out_specs=pl.BlockSpec((1, th, w, 4 * cout), lambda i, t: (i, t, 0, 0)),
        ),
        compiler_params=pltpu.CompilerParams(
            dimension_semantics=("parallel", "parallel"),
            vmem_limit_bytes=32 * 1024 * 1024),
    )(x_pad, w_mat, b4)

    # Depth-to-space (phase interleave) + NCHW: pure XLA layout plumbing.
    out = out_phased.reshape(n, h, w, 2, 2, cout)        # (n, r, c, ph, pw, co)
    out = jnp.transpose(out, (0, 5, 1, 3, 2, 4))         # (n, co, r, ph, c, pw)
    out = out.reshape(n, cout, 2 * h, 2 * w)

    # normalization='none' -> identity.
    # Dropout2d(p=0.5) is identity at inference time.
    # TODO(synk): training-mode Dropout2d (random whole-channel zeroing + 2x scale) not implemented.
    return out


def _reference(x_nchw, weight, bias, mxu_dtype=jnp.bfloat16):
    """Pure-JAX reference: ReLU + ConvTranspose2d via lhs-dilated conv."""
    xr = jnp.maximum(x_nchw, 0.0).astype(mxu_dtype)
    w_conv = jnp.transpose(jnp.flip(weight, axis=(2, 3)), (2, 3, 0, 1)).astype(mxu_dtype)
    out = jax.lax.conv_general_dilated(
        xr, w_conv,
        window_strides=(1, 1),
        padding=((K - 1 - PADDING, K - 1 - PADDING + OUTPUT_PADDING),
                 (K - 1 - PADDING, K - 1 - PADDING + OUTPUT_PADDING)),
        lhs_dilation=(STRIDE, STRIDE),
        dimension_numbers=("NCHW", "HWIO", "NCHW"),
        preferred_element_type=jnp.float32)
    return out + bias.reshape(1, -1, 1, 1).astype(jnp.float32)


if __name__ == "__main__":
    key = jax.random.PRNGKey(0)
    kx, kw, kb = jax.random.split(key, 3)

    batch, in_channels, out_channels, spatial = 2, 4, 8, 16
    x = jax.random.normal(kx, (batch, in_channels, spatial, spatial), jnp.float32)
    weight = 0.1 * jax.random.normal(kw, (in_channels, out_channels, K, K), jnp.float32)
    bias = 0.1 * jax.random.normal(kb, (out_channels,), jnp.float32)

    out = jax.block_until_ready(deconvblock_forward(x, weight, bias))
    assert out.shape == (batch, out_channels, 2 * spatial, 2 * spatial), out.shape

    # Same-precision reference (bf16 operands, fp32 accumulation) via a completely
    # different formulation (lhs-dilated conv) -> validates the sub-pixel math.
    ref_bf16 = jax.block_until_ready(_reference(x, weight, bias, jnp.bfloat16))
    err = float(jnp.max(jnp.abs(out - ref_bf16)))
    assert jnp.allclose(out, ref_bf16, atol=1e-3, rtol=1e-3), err

    # Loose sanity check against the full-fp32 reference (bounds bf16 cast error).
    ref_f32 = jax.block_until_ready(_reference(x, weight, bias, jnp.float32))
    err32 = float(jnp.max(jnp.abs(out - ref_f32)))
    assert jnp.allclose(out, ref_f32, atol=5e-2, rtol=5e-2), err32

    print("KERNEL_OK")
</pallas_src>

<mosaic_0001>
module attributes {stable_mosaic.version = 11 : i64} {
  func.func @_deconv_subpixel_kernel(%arg0: i32, %arg1: i32, %arg2: memref<1x18x18x4xf32, #tpu.memory_space<vmem>>, %arg3: memref<36x32xbf16, #tpu.memory_space<vmem>>, %arg4: memref<1x32xf32, #tpu.memory_space<vmem>>, %arg5: memref<1x8x16x32xf32, #tpu.memory_space<vmem>>) attributes {dimension_semantics = [#tpu.dimension_semantics<parallel>, #tpu.dimension_semantics<parallel>], iteration_bounds = array<i64: 2, 2>, scalar_prefetch = 0 : i64, scratch_operands = 0 : i64, tpu.core_type = #tpu.core_type<tc>, window_params = [{transform_indices = @transform_0, window_bounds = array<i64: 1, 18, 18, 4>}, {pipeline_mode = #tpu.pipeline_mode<synchronous>, transform_indices = @transform_1, window_bounds = array<i64: 36, 32>}, {pipeline_mode = #tpu.pipeline_mode<synchronous>, transform_indices = @transform_2, window_bounds = array<i64: 1, 32>}, {transform_indices = @transform_3, window_bounds = array<i64: 1, 8, 16, 32>}]} {
    %c8_i32 = arith.constant 8 : i32
    %0 = arith.muli %arg1, %c8_i32 : i32
    %1 = tpu.assume_multiple %0, 8 : i32
    %c0 = arith.constant 0 : index
    %2 = arith.index_cast %1 : i32 to index
    %c0_0 = arith.constant 0 : index
    %c0_1 = arith.constant 0 : index
    %3 = vector.load %arg2[%c0, %2, %c0_0, %c0_1] : memref<1x18x18x4xf32, #tpu.memory_space<vmem>>, vector<1x10x18x4xf32>
    %4 = vector.shape_cast %3 : vector<1x10x18x4xf32> to vector<10x18x4xf32>
    %cst = arith.constant 0.000000e+00 : f32
    %5 = vector.broadcast %cst : f32 to vector<10x18x4xf32>
    %6 = arith.maximumf %4, %5 : vector<10x18x4xf32>
    %7 = vector.extract_strided_slice %6 {offsets = [0, 0, 0], sizes = [8, 16, 4], strides = [1, 1, 1]} : vector<10x18x4xf32> to vector<8x16x4xf32>
    %8 = vector.extract_strided_slice %6 {offsets = [0, 1, 0], sizes = [8, 16, 4], strides = [1, 1, 1]} : vector<10x18x4xf32> to vector<8x16x4xf32>
    %9 = vector.extract_strided_slice %6 {offsets = [0, 2, 0], sizes = [8, 16, 4], strides = [1, 1, 1]} : vector<10x18x4xf32> to vector<8x16x4xf32>
    %10 = vector.extract_strided_slice %6 {offsets = [1, 0, 0], sizes = [8, 16, 4], strides = [1, 1, 1]} : vector<10x18x4xf32> to vector<8x16x4xf32>
    %11 = vector.extract_strided_slice %6 {offsets = [1, 1, 0], sizes = [8, 16, 4], strides = [1, 1, 1]} : vector<10x18x4xf32> to vector<8x16x4xf32>
    %12 = vector.extract_strided_slice %6 {offsets = [1, 2, 0], sizes = [8, 16, 4], strides = [1, 1, 1]} : vector<10x18x4xf32> to vector<8x16x4xf32>
    %13 = vector.extract_strided_slice %6 {offsets = [2, 0, 0], sizes = [8, 16, 4], strides = [1, 1, 1]} : vector<10x18x4xf32> to vector<8x16x4xf32>
    %14 = vector.extract_strided_slice %6 {offsets = [2, 1, 0], sizes = [8, 16, 4], strides = [1, 1, 1]} : vector<10x18x4xf32> to vector<8x16x4xf32>
    %15 = vector.extract_strided_slice %6 {offsets = [2, 2, 0], sizes = [8, 16, 4], strides = [1, 1, 1]} : vector<10x18x4xf32> to vector<8x16x4xf32>
    %16 = tpu.concatenate %7, %8, %9, %10, %11, %12, %13, %14, %15 in 2 : vector<8x16x4xf32>, vector<8x16x4xf32>, vector<8x16x4xf32>, vector<8x16x4xf32>, vector<8x16x4xf32>, vector<8x16x4xf32>, vector<8x16x4xf32>, vector<8x16x4xf32>, vector<8x16x4xf32> -> vector<8x16x36xf32>
    %17 = arith.truncf %16 : vector<8x16x36xf32> to vector<8x16x36xbf16>
    %c0_2 = arith.constant 0 : index
    %c0_3 = arith.constant 0 : index
    %18 = vector.load %arg3[%c0_2, %c0_3] : memref<36x32xbf16, #tpu.memory_space<vmem>>, vector<36x32xbf16>
    %cst_4 = arith.constant dense<0.000000e+00> : vector<8x16x32xf32>
    %19 = tpu.matmul %17, %18, %cst_4 {dimension_numbers = #tpu.dot_dimension_numbers<[2], [0], [0, 1], [1], [0, 0, 0, 1, 1, 1], [], []>} : vector<8x16x36xbf16>, vector<36x32xbf16>, vector<8x16x32xf32> -> vector<8x16x32xf32>
    %c0_5 = arith.constant 0 : index
    %c0_6 = arith.constant 0 : index
    %20 = vector.load %arg4[%c0_5, %c0_6] : memref<1x32xf32, #tpu.memory_space<vmem>>, vector<1x32xf32>
    %21 = vector.shape_cast %20 : vector<1x32xf32> to vector<1x1x32xf32>
    %22 = vector.broadcast %21 : vector<1x1x32xf32> to vector<8x16x32xf32>
    %23 = arith.addf %19, %22 : vector<8x16x32xf32>
    %24 = vector.shape_cast %23 : vector<8x16x32xf32> to vector<1x8x16x32xf32>
    %c0_7 = arith.constant 0 : index
    %c0_8 = arith.constant 0 : index
    %c0_9 = arith.constant 0 : index
    %c0_10 = arith.constant 0 : index
    %25 = vector.load %arg5[%c0_7, %c0_8, %c0_9, %c0_10] : memref<1x8x16x32xf32, #tpu.memory_space<vmem>>, vector<1x8x16x32xf32>
    tpu.vector_store %arg5[%c0_7, %c0_8, %c0_9, %c0_10], %24 {strides = array<i32>} : memref<1x8x16x32xf32, #tpu.memory_space<vmem>>, vector<1x8x16x32xf32>,
    return
  }
  func.func @transform_0(%arg0: i32, %arg1: i32) -> (i32, i32, i32, i32) {
    %c0_i32 = arith.constant 0 : i32
    %c0_i32_0 = arith.constant 0 : i32
    %c0_i32_1 = arith.constant 0 : i32
    %c0_i32_2 = arith.constant 0 : i32
    return %arg0, %c0_i32, %c0_i32_0, %c0_i32_1 : i32, i32, i32, i32
  }
  func.func @transform_1(%arg0: i32, %arg1: i32) -> (i32, i32) {
    %c0_i32 = arith.constant 0 : i32
    %c0_i32_0 = arith.constant 0 : i32
    %c0_i32_1 = arith.constant 0 : i32
    return %c0_i32, %c0_i32_0 : i32, i32
  }
  func.func @transform_2(%arg0: i32, %arg1: i32) -> (i32, i32) {
    %c0_i32 = arith.constant 0 : i32
    %c0_i32_0 = arith.constant 0 : i32
    %c0_i32_1 = arith.constant 0 : i32
    return %c0_i32, %c0_i32_0 : i32, i32
  }
  func.func @transform_3(%arg0: i32, %arg1: i32) -> (i32, i32, i32, i32) {
    %c0_i32 = arith.constant 0 : i32
    %c0_i32_0 = arith.constant 0 : i32
    %c0_i32_1 = arith.constant 0 : i32
    return %arg0, %arg1, %c0_i32, %c0_i32_0 : i32, i32, i32, i32
  }
}

</mosaic_0001>

<llo_original>
// kernel: tpu_custom_call.1
$region0: #{tpu_custom_call.1}
  #allocation0 [shape = 'u32[]', space=smem, size = 0x4, offset = 0x4, fixed_abs, tag = 'smem constant byte address 0x4 - core index']
  #allocation1 [shape = 'u32[144,128]{1,0:T(1,128)}', space=vmem, size = 0x12000, scoped, tag = 'internal scratch']
  %s0 = inlined_call_operand.vmem [shape: f32[2,18,18,4], index: 0, kind: input, shape index: {}]
  %s1 = inlined_call_operand.vmem [shape: bf16[36,32], index: 1, kind: input, shape index: {}]
  %s2 = inlined_call_operand.vmem [shape: f32[1,32], index: 2, kind: input, shape index: {}]
  %s3 = inlined_call_operand.hbm [shape: f32[2,16,16,32], index: 3, kind: output, shape index: {}]
  %s4 = sld [smem:[#allocation0]]
  $region45: #{tpu_custom_call.1} parent=0
    _
  %s6 = ssub.s32 1, %s4
  %s7 = scalar_select 0, %s6, %s4
  $region1: #{tpu_custom_call.1} parent=0
    #allocation2 [shape = 'u8[131072]{0}', space=vmem, size = 0x20000, scoped, tag = 'output window, operand 0']
    #allocation3 [shape = 's32[2]{0}', space=sflag, size = 0x8, scoped, tag = 'scoped memory for tpu_custom_call.1']
    %8 = vsyncpa [#allocation3], 0
    %s9 = scalar_lea.sflag [#allocation3], 1
    %10 = vsyncpa %s9, 0
    loop: start=0, step=1, limit=6
    $region2: #{tpu_custom_call.1} parent=1 // loop_pre_header
      _
    $region3: #{tpu_custom_call.1} parent=1 // loop_header
      %s12 = sphi 0, %s16
      %p13 = scmp.ge.s32.totalorder %s12, 6
      %s19 = sphi 0, %s31
      %s20 = sphi 0, %s27
      %s21 = sphi 0, %s19
      %s22 = sphi 0, %s20
      %s23 = sphi 0, %s21
      %s24 = sphi 0, %s22
      %s34 = sphi 0, %s36
      %s37 = sphi 0, %s34
      %s38 = sphi 0, %s37
      %s54 = sphi 0, %s38
      %s58 = sphi 0, %s58
      %s60 = sphi 0, %s58
      %s61 = sphi 0, %s60
      %s75 = sphi 0, %s61
      %s79 = sphi 0, %s79
      %s81 = sphi 0, %s79
      %s82 = sphi 0, %s81
      %s96 = sphi 0, %s82
      %s104 = sphi 0, %s106
      %s107 = sphi 0, %s104
      %s108 = sphi 0, %s107
      %s124 = sphi 0, %s108
    $region4: #{tpu_custom_call.1} parent=1 // loop_header_branch
      %15 = sbr.rel (%p13) target = $region8
    $region5: #{tpu_custom_call.1} parent=1 // loop_body
      %s17 = ssub.s32 %s12, 1
      %s18 = ssub.s32 %s12, 2
      %s25 = sadd.s32 1, %s20
      %p26 = scmp.ge.s32.totalorder %s25, 2
      %s27 = scalar_select %p26, 0, %s25
      %s28 = sadd.s32 1, %s19
      %s29 = scalar_select %p26, %s28, %s19
      %p30 = scmp.ge.s32.totalorder %s29, 2
      %s31 = scalar_select %p30, 0, %s29
      %s32 = ssub.s32 %s19, %s31
      %p33 = scmp.eq.s32.totalorder %s32, 0
      %s35 = sadd.s32 %s34, 1
      %s36 = scalar_select %p33, %s34, %s35
      %p39 = pneg %p33
      %p40 = scmp.eq.s32.totalorder %s12, 3
      %p41 = por %p39, %p40
      %p42 = scmp.ne.s32.totalorder %s34, %s37
      %p43 = scmp.eq.s32.totalorder %s12, 0
      %p44 = por %p42, %p43
      %p45 = scmp.ne.s32.totalorder %s34, %s37
      %p46 = scmp.eq.s32.totalorder %s17, 3
      %p47 = por %p45, %p46
      %p48 = scmp.ne.s32.totalorder %s37, %s38
      %p49 = scmp.eq.s32.totalorder %s17, 0
      %p50 = por %p48, %p49
      %p51 = scmp.ne.s32.totalorder %s37, %s38
      %p52 = scmp.eq.s32.totalorder %s18, 3
      %p53 = por %p51, %p52
      %p55 = scmp.ne.s32.totalorder %s38, %s54
      %p56 = scmp.eq.s32.totalorder %s18, 0
      %p57 = por %p55, %p56
      %s59 = sadd.s32 %s58, 1
      %p62 = scmp.eq.s32.totalorder %s12, 3
      %p63 = scmp.ne.s32.totalorder %s58, %s60
      %p64 = scmp.eq.s32.totalorder %s12, 0
      %p65 = por %p63, %p64
      %p66 = scmp.ne.s32.totalorder %s58, %s60
      %p67 = scmp.eq.s32.totalorder %s17, 3
      %p68 = por %p66, %p67
      %p69 = scmp.ne.s32.totalorder %s60, %s61
      %p70 = scmp.eq.s32.totalorder %s17, 0
      %p71 = por %p69, %p70
      %p72 = scmp.ne.s32.totalorder %s60, %s61
      %p73 = scmp.eq.s32.totalorder %s18, 3
      %p74 = por %p72, %p73
      %p76 = scmp.ne.s32.totalorder %s61, %s75
      %p77 = scmp.eq.s32.totalorder %s18, 0
      %p78 = por %p76, %p77
      %s80 = sadd.s32 %s79, 1
      %p83 = scmp.eq.s32.totalorder %s12, 3
      %p84 = scmp.ne.s32.totalorder %s79, %s81
      %p85 = scmp.eq.s32.totalorder %s12, 0
      %p86 = por %p84, %p85
      %p87 = scmp.ne.s32.totalorder %s79, %s81
      %p88 = scmp.eq.s32.totalorder %s17, 3
      %p89 = por %p87, %p88
      %p90 = scmp.ne.s32.totalorder %s81, %s82
      %p91 = scmp.eq.s32.totalorder %s17, 0
      %p92 = por %p90, %p91
      %p93 = scmp.ne.s32.totalorder %s81, %s82
      %p94 = scmp.eq.s32.totalorder %s18, 3
      %p95 = por %p93, %p94
      %p97 = scmp.ne.s32.totalorder %s82, %s96
      %p98 = scmp.eq.s32.totalorder %s18, 0
      %p99 = por %p97, %p98
      %s100 = ssub.s32 %s19, %s31
      %s101 = ssub.s32 %s20, %s27
      %s102 = sor.u32 %s100, %s101
      %p103 = scmp.eq.s32.totalorder %s102, 0
      %s105 = sadd.s32 %s104, 1
      %s106 = scalar_select %p103, %s104, %s105
      %p109 = pneg %p103
      %p110 = scmp.eq.s32.totalorder %s12, 3
      %p111 = por %p109, %p110
      %p112 = scmp.ne.s32.totalorder %s104, %s107
      %p113 = scmp.eq.s32.totalorder %s12, 0
      %p114 = por %p112, %p113
      %p115 = scmp.ne.s32.totalorder %s104, %s107
      %p116 = scmp.eq.s32.totalorder %s17, 3
      %p117 = por %p115, %p116
      %p118 = scmp.ne.s32.totalorder %s107, %s108
      %p119 = scmp.eq.s32.totalorder %s17, 0
      %p120 = por %p118, %p119
      %p121 = scmp.ne.s32.totalorder %s107, %s108
      %p122 = scmp.eq.s32.totalorder %s18, 3
      %p123 = por %p121, %p122
      %p125 = scmp.ne.s32.totalorder %s108, %s124
      %p126 = scmp.eq.s32.totalorder %s18, 0
      %p127 = por %p125, %p126
      %p128 = scmp.le.s32.totalorder 1, %s12
      %p129 = scmp.lt.s32.totalorder %s12, 5
      %p130 = pnand %p128, %p129
      %p131 = pneg %p130
      // Predicated region
      $region9: #{tpu_custom_call.1} parent=5 // pred_check
        _
      $region10: #{tpu_custom_call.1} parent=5 // pred_check_branch
        %133 = sbr.rel (%p130) target = $region12
      $region11: #{tpu_custom_call.1} parent=5 // pred_region
        %s134 = ssub.s32 %s12, 1
        // Predicated region
        $region13: #{tpu_custom_call.1} parent=11 // pred_check
          %p135 = pneg %p71
        $region14: #{tpu_custom_call.1} parent=11 // pred_check_branch
          %137 = sbr.rel (%p135) target = $region16
        $region15: #{tpu_custom_call.1} parent=11 // pred_region
          _
        $region16: #{tpu_custom_call.1} parent=11 // pred_fallthru
          _
        // Predicated region
        $region17: #{tpu_custom_call.1} parent=11 // pred_check
          %p138 = pneg %p92
        $region18: #{tpu_custom_call.1} parent=11 // pred_check_branch
          %140 = sbr.rel (%p138) target = $region20
        $region19: #{tpu_custom_call.1} parent=11 // pred_region
          _
        $region20: #{tpu_custom_call.1} parent=11 // pred_fallthru
          _
      $region12: #{tpu_custom_call.1} parent=5 // pred_fallthru
        _
      %p141 = scmp.lt.s32.totalorder %s12, 4
      // Predicated region
      $region21: #{tpu_custom_call.1} parent=5 // pred_check
        %p142 = pneg %p141
      $region22: #{tpu_custom_call.1} parent=5 // pred_check_branch
        %144 = sbr.rel (%p142) target = $region24
      $region23: #{tpu_custom_call.1} parent=5 // pred_region
        // Predicated region
        $region25: #{tpu_custom_call.1} parent=23 // pred_check
          %p145 = pneg %p44
        $region26: #{tpu_custom_call.1} parent=23 // pred_check_branch
          %147 = sbr.rel (%p145) target = $region28
        $region27: #{tpu_custom_call.1} parent=23 // pred_region
          %p148 = scmp.lt.s32.totalorder %s19, 1
          %s149 = scalar_select %p148, %s19, 1
          %s150 = smul.addr %s149, 54
          %s151 = smul.addr %s150, 8
          %s152 = scalar_lea.vmem %s0, %s151
        $region28: #{tpu_custom_call.1} parent=23 // pred_fallthru
          _
      $region24: #{tpu_custom_call.1} parent=5 // pred_fallthru
        _
      %p153 = scmp.le.s32.totalorder 1, %s12
      %p154 = scmp.lt.s32.totalorder %s12, 5
      %p155 = pnand %p153, %p154
      %p156 = pneg %p155
      // Predicated region
      $region29: #{tpu_custom_call.1} parent=5 // pred_check
        _
      $region30: #{tpu_custom_call.1} parent=5 // pred_check_branch
        %158 = sbr.rel (%p155) target = $region32
      $region31: #{tpu_custom_call.1} parent=5 // pred_region
        %s159 = ssub.s32 %s12, 1
        %p160 = scmp.lt.s32.totalorder %s21, 1
        %s161 = scalar_select %p160, %s21, 1
        %s162 = smul.addr %s161, 54
        %s163 = smul.addr %s162, 8
        %s164 = scalar_lea.vmem %s0, %s163
        %p165 = pneg %p50
        %p166 = pneg %p47
        %p167 = pneg %p71
        %p168 = pneg %p68
        %p169 = pneg %p92
        %p170 = pneg %p89
        %p171 = pneg %p120
        %p172 = pneg %p117
        %s173 = sand.u32 %s107, 1
        %s174 = scalar_lea.sflag [#allocation3], %s173
        %s175 = sand.u32 %s107, 1
        %s176 = smul.addr %s175, 128
        %s177 = scalar_lea.vmem [#allocation2], %s176
        %p178 = scmp.lt.s32.totalorder %s21, 1
        %s179 = scalar_select %p178, %s21, 1
        %s180 = smul.addr %s179, 54
        %s181 = smul.addr %s180, 8
        %s182 = scalar_lea.vmem %s0, %s181
        %s183 = smul.u32 8, %s22
        %s185 = smul.u32 %s22, 8
        %s186 = smul.u32 %s185, 24
        %s187 = scalar_lea.vmem %s182, %s186
        %v188 = vld [vmem:[%s187] sm:$0xff]
        %v189 = vld [vmem:[%s187 + $0x8] sm:$0xff]
        %v190 = vld [vmem:[%s187 + $0x10] sm:$0x3]
        %v191 = vld [vmem:[%s187 + $0x18] sm:$0xff]
        %v192 = vld [vmem:[%s187 + $0x20] sm:$0xff]
        %v193 = vld [vmem:[%s187 + $0x28] sm:$0x3]
        %v194 = vld [vmem:[%s187 + $0x30] sm:$0xff]
        %v195 = vld [vmem:[%s187 + $0x38] sm:$0xff]
        %v196 = vld [vmem:[%s187 + $0x40] sm:$0x3]
        %v197 = vld [vmem:[%s187 + $0x48] sm:$0xff]
        %v198 = vld [vmem:[%s187 + $0x50] sm:$0xff]
        %v199 = vld [vmem:[%s187 + $0x58] sm:$0x3]
        %v200 = vld [vmem:[%s187 + $0x60] sm:$0xff]
        %v201 = vld [vmem:[%s187 + $0x68] sm:$0xff]
        %v202 = vld [vmem:[%s187 + $0x70] sm:$0x3]
        %v203 = vld [vmem:[%s187 + $0x78] sm:$0xff]
        %v204 = vld [vmem:[%s187 + $0x80] sm:$0xff]
        %v205 = vld [vmem:[%s187 + $0x88] sm:$0x3]
        %v206 = vld [vmem:[%s187 + $0x90] sm:$0xff]
        %v207 = vld [vmem:[%s187 + $0x98] sm:$0xff]
        %v208 = vld [vmem:[%s187 + $0xa0] sm:$0x3]
        %v209 = vld [vmem:[%s187 + $0xa8] sm:$0xff]
        %v210 = vld [vmem:[%s187 + $0xb0] sm:$0xff]
        %v211 = vld [vmem:[%s187 + $0xb8] sm:$0x3]
        %v212 = vld [vmem:[%s187 + $0xc0] sm:$0xff]
        %v213 = vld [vmem:[%s187 + $0xc8] sm:$0xff]
        %v214 = vld [vmem:[%s187 + $0xd0] sm:$0x3]
        %v215 = vld [vmem:[%s187 + $0xd8] sm:$0xff]
        %v216 = vld [vmem:[%s187 + $0xe0] sm:$0xff]
        %v217 = vld [vmem:[%s187 + $0xe8] sm:$0x3]
        %v218 = vmax.f32 %v188, 0.0
        %v219 = vmax.f32 %v189, 0.0
        %v220 = vmax.f32 %v190, 0.0
        %v221 = vmax.f32 %v191, 0.0
        %v222 = vmax.f32 %v192, 0.0
        %v223 = vmax.f32 %v193, 0.0
        %v224 = vmax.f32 %v194, 0.0
        %v225 = vmax.f32 %v195, 0.0
        %v226 = vmax.f32 %v196, 0.0
        %v227 = vmax.f32 %v197, 0.0
        %v228 = vmax.f32 %v198, 0.0
        %v229 = vmax.f32 %v199, 0.0
        %v230 = vmax.f32 %v200, 0.0
        %v231 = vmax.f32 %v201, 0.0
        %v232 = vmax.f32 %v202, 0.0
        %v233 = vmax.f32 %v203, 0.0
        %v234 = vmax.f32 %v204, 0.0
        %v235 = vmax.f32 %v205, 0.0
        %v236 = vmax.f32 %v206, 0.0
        %v237 = vmax.f32 %v207, 0.0
        %v238 = vmax.f32 %v208, 0.0
        %v239 = vmax.f32 %v209, 0.0
        %v240 = vmax.f32 %v210, 0.0
        %v241 = vmax.f32 %v211, 0.0
        %v242 = vmax.f32 %v212, 0.0
        %v243 = vmax.f32 %v213, 0.0
        %v244 = vmax.f32 %v214, 0.0
        %v245 = vmax.f32 %v215, 0.0
        %v246 = vmax.f32 %v216, 0.0
        %v247 = vmax.f32 %v217, 0.0
        %vm272 = vcmask 1046528
        %v273 = vrot.slane %v218, 1
        %v274 = vrot.slane %v219, 1
        %v275 = vsel %vm272, %v273, %v274
        %v276 = vrot.slane %v220, 1
        %v277 = vsel %vm272, %v274, %v276
        %v278 = vrot.slane %v221, 1
        %v279 = vrot.slane %v222, 1
        %v280 = vsel %vm272, %v278, %v279
        %v281 = vrot.slane %v223, 1
        %v282 = vsel %vm272, %v279, %v281
        %v283 = vrot.slane %v224, 1
        %v284 = vrot.slane %v225, 1
        %v285 = vsel %vm272, %v283, %v284
        %v286 = vrot.slane %v226, 1
        %v287 = vsel %vm272, %v284, %v286
        %v288 = vrot.slane %v227, 1
        %v289 = vrot.slane %v228, 1
        %v290 = vsel %vm272, %v288, %v289
        %v291 = vrot.slane %v229, 1
        %v292 = vsel %vm272, %v289, %v291
        %v293 = vrot.slane %v230, 1
        %v294 = vrot.slane %v231, 1
        %v295 = vsel %vm272, %v293, %v294
        %v296 = vrot.slane %v232, 1
        %v297 = vsel %vm272, %v294, %v296
        %v298 = vrot.slane %v233, 1
        %v299 = vrot.slane %v234, 1
        %v300 = vsel %vm272, %v298, %v299
        %v301 = vrot.slane %v235, 1
        %v302 = vsel %vm272, %v299, %v301
        %v303 = vrot.slane %v236, 1
        %v304 = vrot.slane %v237, 1
        %v305 = vsel %vm272, %v303, %v304
        %v306 = vrot.slane %v238, 1
        %v307 = vsel %vm272, %v304, %v306
        %v308 = vrot.slane %v239, 1
        %v309 = vrot.slane %v240, 1
        %v310 = vsel %vm272, %v308, %v309
        %v311 = vrot.slane %v241, 1
        %v312 = vsel %vm272, %v309, %v311
        %313 = vrot.lane.b32.xlu0 %v275, 4
        %v314 = vpop.permute.xlu0 %313
        %315 = vrot.lane.b32.xlu0 %v277, 4
        %v316 = vpop.permute.xlu0 %315
        %317 = vrot.lane.b32.xlu0 %v280, 4
        %v318 = vpop.permute.xlu0 %317
        %319 = vrot.lane.b32.xlu0 %v282, 4
        %v320 = vpop.permute.xlu0 %319
        %321 = vrot.lane.b32.xlu0 %v285, 4
        %v322 = vpop.permute.xlu0 %321
        %323 = vrot.lane.b32.xlu0 %v287, 4
        %v324 = vpop.permute.xlu0 %323
        %325 = vrot.lane.b32.xlu0 %v290, 4
        %v326 = vpop.permute.xlu0 %325
        %327 = vrot.lane.b32.xlu0 %v292, 4
        %v328 = vpop.permute.xlu0 %327
        %329 = vrot.lane.b32.xlu0 %v295, 4
        %v330 = vpop.permute.xlu0 %329
        %331 = vrot.lane.b32.xlu0 %v297, 4
        %v332 = vpop.permute.xlu0 %331
        %333 = vrot.lane.b32.xlu0 %v300, 4
        %v334 = vpop.permute.xlu0 %333
        %335 = vrot.lane.b32.xlu0 %v302, 4
        %v336 = vpop.permute.xlu0 %335
        %337 = vrot.lane.b32.xlu0 %v305, 4
        %v338 = vpop.permute.xlu0 %337
        %339 = vrot.lane.b32.xlu0 %v307, 4
        %v340 = vpop.permute.xlu0 %339
        %341 = vrot.lane.b32.xlu0 %v310, 4
        %v342 = vpop.permute.xlu0 %341
        %343 = vrot.lane.b32.xlu0 %v312, 4
        %v344 = vpop.permute.xlu0 %343
        %vm361 = vcmask 1045504
        %v362 = vrot.slane %v218, 2
        %v363 = vrot.slane %v219, 2
        %v364 = vsel %vm361, %v362, %v363
        %v365 = vrot.slane %v220, 2
        %v366 = vsel %vm361, %v363, %v365
        %v367 = vrot.slane %v221, 2
        %v368 = vrot.slane %v222, 2
        %v369 = vsel %vm361, %v367, %v368
        %v370 = vrot.slane %v223, 2
        %v371 = vsel %vm361, %v368, %v370
        %v372 = vrot.slane %v224, 2
        %v373 = vrot.slane %v225, 2
        %v374 = vsel %vm361, %v372, %v373
        %v375 = vrot.slane %v226, 2
        %v376 = vsel %vm361, %v373, %v375
        %v377 = vrot.slane %v227, 2
        %v378 = vrot.slane %v228, 2
        %v379 = vsel %vm361, %v377, %v378
        %v380 = vrot.slane %v229, 2
        %v381 = vsel %vm361, %v378, %v380
        %v382 = vrot.slane %v230, 2
        %v383 = vrot.slane %v231, 2
        %v384 = vsel %vm361, %v382, %v383
        %v385 = vrot.slane %v232, 2
        %v386 = vsel %vm361, %v383, %v385
        %v387 = vrot.slane %v233, 2
        %v388 = vrot.slane %v234, 2
        %v389 = vsel %vm361, %v387, %v388
        %v390 = vrot.slane %v235, 2
        %v391 = vsel %vm361, %v388, %v390
        %v392 = vrot.slane %v236, 2
        %v393 = vrot.slane %v237, 2
        %v394 = vsel %vm361, %v392, %v393
        %v395 = vrot.slane %v238, 2
        %v396 = vsel %vm361, %v393, %v395
        %v397 = vrot.slane %v239, 2
        %v398 = vrot.slane %v240, 2
        %v399 = vsel %vm361, %v397, %v398
        %v400 = vrot.slane %v241, 2
        %v401 = vsel %vm361, %v398, %v400
        %402 = vrot.lane.b32.xlu0 %v364, 8
        %v403 = vpop.permute.xlu0 %402
        %404 = vrot.lane.b32.xlu0 %v366, 8
        %v405 = vpop.permute.xlu0 %404
        %406 = vrot.lane.b32.xlu0 %v369, 8
        %v407 = vpop.permute.xlu0 %406
        %408 = vrot.lane.b32.xlu0 %v371, 8
        %v409 = vpop.permute.xlu0 %408
        %410 = vrot.lane.b32.xlu0 %v374, 8
        %v411 = vpop.permute.xlu0 %410
        %412 = vrot.lane.b32.xlu0 %v376, 8
        %v413 = vpop.permute.xlu0 %412
        %414 = vrot.lane.b32.xlu0 %v379, 8
        %v415 = vpop.permute.xlu0 %414
        %416 = vrot.lane.b32.xlu0 %v381, 8
        %v417 = vpop.permute.xlu0 %416
        %418 = vrot.lane.b32.xlu0 %v384, 8
        %v419 = vpop.permute.xlu0 %418
        %420 = vrot.lane.b32.xlu0 %v386, 8
        %v421 = vpop.permute.xlu0 %420
        %422 = vrot.lane.b32.xlu0 %v389, 8
        %v423 = vpop.permute.xlu0 %422
        %424 = vrot.lane.b32.xlu0 %v391, 8
        %v425 = vpop.permute.xlu0 %424
        %426 = vrot.lane.b32.xlu0 %v394, 8
        %v427 = vpop.permute.xlu0 %426
        %428 = vrot.lane.b32.xlu0 %v396, 8
        %v429 = vpop.permute.xlu0 %428
        %430 = vrot.lane.b32.xlu0 %v399, 8
        %v431 = vpop.permute.xlu0 %430
        %432 = vrot.lane.b32.xlu0 %v401, 8
        %v433 = vpop.permute.xlu0 %432
        %452 = vrot.lane.b32.xlu0 %v221, 12
        %v453 = vpop.permute.xlu0 %452
        %454 = vrot.lane.b32.xlu0 %v222, 12
        %v455 = vpop.permute.xlu0 %454
        %456 = vrot.lane.b32.xlu0 %v224, 12
        %v457 = vpop.permute.xlu0 %456
        %458 = vrot.lane.b32.xlu0 %v225, 12
        %v459 = vpop.permute.xlu0 %458
        %460 = vrot.lane.b32.xlu0 %v227, 12
        %v461 = vpop.permute.xlu0 %460
        %462 = vrot.lane.b32.xlu0 %v228, 12
        %v463 = vpop.permute.xlu0 %462
        %464 = vrot.lane.b32.xlu0 %v230, 12
        %v465 = vpop.permute.xlu0 %464
        %466 = vrot.lane.b32.xlu0 %v231, 12
        %v467 = vpop.permute.xlu0 %466
        %468 = vrot.lane.b32.xlu0 %v233, 12
        %v469 = vpop.permute.xlu0 %468
        %470 = vrot.lane.b32.xlu0 %v234, 12
        %v471 = vpop.permute.xlu0 %470
        %472 = vrot.lane.b32.xlu0 %v236, 12
        %v473 = vpop.permute.xlu0 %472
        %474 = vrot.lane.b32.xlu0 %v237, 12
        %v475 = vpop.permute.xlu0 %474
        %476 = vrot.lane.b32.xlu0 %v239, 12
        %v477 = vpop.permute.xlu0 %476
        %478 = vrot.lane.b32.xlu0 %v240, 12
        %v479 = vpop.permute.xlu0 %478
        %480 = vrot.lane.b32.xlu0 %v242, 12
        %v481 = vpop.permute.xlu0 %480
        %482 = vrot.lane.b32.xlu0 %v243, 12
        %v483 = vpop.permute.xlu0 %482
        %v501 = vrot.slane %v242, 1
        %v502 = vrot.slane %v243, 1
        %v503 = vsel %vm272, %v501, %v502
        %v504 = vrot.slane %v244, 1
        %v505 = vsel %vm272, %v502, %v504
        %506 = vrot.lane.b32.xlu0 %v280, 16
        %v507 = vpop.permute.xlu0 %506
        %508 = vrot.lane.b32.xlu0 %v282, 16
        %v509 = vpop.permute.xlu0 %508
        %510 = vrot.lane.b32.xlu0 %v285, 16
        %v511 = vpop.permute.xlu0 %510
        %512 = vrot.lane.b32.xlu0 %v287, 16
        %v513 = vpop.permute.xlu0 %512
        %514 = vrot.lane.b32.xlu0 %v290, 16
        %v515 = vpop.permute.xlu0 %514
        %516 = vrot.lane.b32.xlu0 %v292, 16
        %v517 = vpop.permute.xlu0 %516
        %518 = vrot.lane.b32.xlu0 %v295, 16
        %v519 = vpop.permute.xlu0 %518
        %520 = vrot.lane.b32.xlu0 %v297, 16
        %v521 = vpop.permute.xlu0 %520
        %522 = vrot.lane.b32.xlu0 %v300, 16
        %v523 = vpop.permute.xlu0 %522
        %524 = vrot.lane.b32.xlu0 %v302, 16
        %v525 = vpop.permute.xlu0 %524
        %526 = vrot.lane.b32.xlu0 %v305, 16
        %v527 = vpop.permute.xlu0 %526
        %528 = vrot.lane.b32.xlu0 %v307, 16
        %v529 = vpop.permute.xlu0 %528
        %530 = vrot.lane.b32.xlu0 %v310, 16
        %v531 = vpop.permute.xlu0 %530
        %532 = vrot.lane.b32.xlu0 %v312, 16
        %v533 = vpop.permute.xlu0 %532
        %534 = vrot.lane.b32.xlu0 %v503, 16
        %v535 = vpop.permute.xlu0 %534
        %536 = vrot.lane.b32.xlu0 %v505, 16
        %v537 = vpop.permute.xlu0 %536
        %v554 = vrot.slane %v242, 2
        %v555 = vrot.slane %v243, 2
        %v556 = vsel %vm361, %v554, %v555
        %v557 = vrot.slane %v244, 2
        %v558 = vsel %vm361, %v555, %v557
        %559 = vrot.lane.b32.xlu0 %v369, 20
        %v560 = vpop.permute.xlu0 %559
        %561 = vrot.lane.b32.xlu0 %v371, 20
        %v562 = vpop.permute.xlu0 %561
        %563 = vrot.lane.b32.xlu0 %v374, 20
        %v564 = vpop.permute.xlu0 %563
        %565 = vrot.lane.b32.xlu0 %v376, 20
        %v566 = vpop.permute.xlu0 %565
        %567 = vrot.lane.b32.xlu0 %v379, 20
        %v568 = vpop.permute.xlu0 %567
        %569 = vrot.lane.b32.xlu0 %v381, 20
        %v570 = vpop.permute.xlu0 %569
        %571 = vrot.lane.b32.xlu0 %v384, 20
        %v572 = vpop.permute.xlu0 %571
        %573 = vrot.lane.b32.xlu0 %v386, 20
        %v574 = vpop.permute.xlu0 %573
        %575 = vrot.lane.b32.xlu0 %v389, 20
        %v576 = vpop.permute.xlu0 %575
        %577 = vrot.lane.b32.xlu0 %v391, 20
        %v578 = vpop.permute.xlu0 %577
        %579 = vrot.lane.b32.xlu0 %v394, 20
        %v580 = vpop.permute.xlu0 %579
        %581 = vrot.lane.b32.xlu0 %v396, 20
        %v582 = vpop.permute.xlu0 %581
        %583 = vrot.lane.b32.xlu0 %v399, 20
        %v584 = vpop.permute.xlu0 %583
        %585 = vrot.lane.b32.xlu0 %v401, 20
        %v586 = vpop.permute.xlu0 %585
        %587 = vrot.lane.b32.xlu0 %v556, 20
        %v588 = vpop.permute.xlu0 %587
        %589 = vrot.lane.b32.xlu0 %v558, 20
        %v590 = vpop.permute.xlu0 %589
        %609 = vrot.lane.b32.xlu0 %v224, 24
        %v610 = vpop.permute.xlu0 %609
        %611 = vrot.lane.b32.xlu0 %v225, 24
        %v612 = vpop.permute.xlu0 %611
        %613 = vrot.lane.b32.xlu0 %v227, 24
        %v614 = vpop.permute.xlu0 %613
        %615 = vrot.lane.b32.xlu0 %v228, 24
        %v616 = vpop.permute.xlu0 %615
        %617 = vrot.lane.b32.xlu0 %v230, 24
        %v618 = vpop.permute.xlu0 %617
        %619 = vrot.lane.b32.xlu0 %v231, 24
        %v620 = vpop.permute.xlu0 %619
        %621 = vrot.lane.b32.xlu0 %v233, 24
        %v622 = vpop.permute.xlu0 %621
        %623 = vrot.lane.b32.xlu0 %v234, 24
        %v624 = vpop.permute.xlu0 %623
        %625 = vrot.lane.b32.xlu0 %v236, 24
        %v626 = vpop.permute.xlu0 %625
        %627 = vrot.lane.b32.xlu0 %v237, 24
        %v628 = vpop.permute.xlu0 %627
        %629 = vrot.lane.b32.xlu0 %v239, 24
        %v630 = vpop.permute.xlu0 %629
        %631 = vrot.lane.b32.xlu0 %v240, 24
        %v632 = vpop.permute.xlu0 %631
        %633 = vrot.lane.b32.xlu0 %v242, 24
        %v634 = vpop.permute.xlu0 %633
        %635 = vrot.lane.b32.xlu0 %v243, 24
        %v636 = vpop.permute.xlu0 %635
        %637 = vrot.lane.b32.xlu0 %v245, 24
        %v638 = vpop.permute.xlu0 %637
        %639 = vrot.lane.b32.xlu0 %v246, 24
        %v640 = vpop.permute.xlu0 %639
        %v658 = vrot.slane %v245, 1
        %v659 = vrot.slane %v246, 1
        %v660 = vsel %vm272, %v658, %v659
        %v661 = vrot.slane %v247, 1
        %v662 = vsel %vm272, %v659, %v661
        %663 = vrot.lane.b32.xlu0 %v285, 28
        %v664 = vpop.permute.xlu0 %663
        %665 = vrot.lane.b32.xlu0 %v287, 28
        %v666 = vpop.permute.xlu0 %665
        %667 = vrot.lane.b32.xlu0 %v290, 28
        %v668 = vpop.permute.xlu0 %667
        %669 = vrot.lane.b32.xlu0 %v292, 28
        %v670 = vpop.permute.xlu0 %669
        %671 = vrot.lane.b32.xlu0 %v295, 28
        %v672 = vpop.permute.xlu0 %671
        %673 = vrot.lane.b32.xlu0 %v297, 28
        %v674 = vpop.permute.xlu0 %673
        %675 = vrot.lane.b32.xlu0 %v300, 28
        %v676 = vpop.permute.xlu0 %675
        %677 = vrot.lane.b32.xlu0 %v302, 28
        %v678 = vpop.permute.xlu0 %677
        %679 = vrot.lane.b32.xlu0 %v305, 28
        %v680 = vpop.permute.xlu0 %679
        %681 = vrot.lane.b32.xlu0 %v307, 28
        %v682 = vpop.permute.xlu0 %681
        %683 = vrot.lane.b32.xlu0 %v310, 28
        %v684 = vpop.permute.xlu0 %683
        %685 = vrot.lane.b32.xlu0 %v312, 28
        %v686 = vpop.permute.xlu0 %685
        %687 = vrot.lane.b32.xlu0 %v503, 28
        %v688 = vpop.permute.xlu0 %687
        %689 = vrot.lane.b32.xlu0 %v505, 28
        %v690 = vpop.permute.xlu0 %689
        %691 = vrot.lane.b32.xlu0 %v660, 28
        %v692 = vpop.permute.xlu0 %691
        %693 = vrot.lane.b32.xlu0 %v662, 28
        %v694 = vpop.permute.xlu0 %693
        %v711 = vrot.slane %v245, 2
        %v712 = vrot.slane %v246, 2
        %v713 = vsel %vm361, %v711, %v712
        %v714 = vrot.slane %v247, 2
        %v715 = vsel %vm361, %v712, %v714
        %716 = vrot.lane.b32.xlu0 %v374, 32
        %v717 = vpop.permute.xlu0 %716
        %718 = vrot.lane.b32.xlu0 %v376, 32
        %v719 = vpop.permute.xlu0 %718
        %720 = vrot.lane.b32.xlu0 %v379, 32
        %v721 = vpop.permute.xlu0 %720
        %722 = vrot.lane.b32.xlu0 %v381, 32
        %v723 = vpop.permute.xlu0 %722
        %724 = vrot.lane.b32.xlu0 %v384, 32
        %v725 = vpop.permute.xlu0 %724
        %726 = vrot.lane.b32.xlu0 %v386, 32
        %v727 = vpop.permute.xlu0 %726
        %728 = vrot.lane.b32.xlu0 %v389, 32
        %v729 = vpop.permute.xlu0 %728
        %730 = vrot.lane.b32.xlu0 %v391, 32
        %v731 = vpop.permute.xlu0 %730
        %732 = vrot.lane.b32.xlu0 %v394, 32
        %v733 = vpop.permute.xlu0 %732
        %734 = vrot.lane.b32.xlu0 %v396, 32
        %v735 = vpop.permute.xlu0 %734
        %736 = vrot.lane.b32.xlu0 %v399, 32
        %v737 = vpop.permute.xlu0 %736
        %738 = vrot.lane.b32.xlu0 %v401, 32
        %v739 = vpop.permute.xlu0 %738
        %740 = vrot.lane.b32.xlu0 %v556, 32
        %v741 = vpop.permute.xlu0 %740
        %742 = vrot.lane.b32.xlu0 %v558, 32
        %v743 = vpop.permute.xlu0 %742
        %744 = vrot.lane.b32.xlu0 %v713, 32
        %v745 = vpop.permute.xlu0 %744
        %746 = vrot.lane.b32.xlu0 %v715, 32
        %v747 = vpop.permute.xlu0 %746
        %vm764 = vcmask 31744
        %v765 = vsel %vm764, %v218, %v314
        %v766 = vsel %vm764, %v219, %v316
        %v767 = vsel %vm764, %v221, %v318
        %v768 = vsel %vm764, %v222, %v320
        %v769 = vsel %vm764, %v224, %v322
        %v770 = vsel %vm764, %v225, %v324
        %v771 = vsel %vm764, %v227, %v326
        %v772 = vsel %vm764, %v228, %v328
        %v773 = vsel %vm764, %v230, %v330
        %v774 = vsel %vm764, %v231, %v332
        %v775 = vsel %vm764, %v233, %v334
        %v776 = vsel %vm764, %v234, %v336
        %v777 = vsel %vm764, %v236, %v338
        %v778 = vsel %vm764, %v237, %v340
        %v779 = vsel %vm764, %v239, %v342
        %v780 = vsel %vm764, %v240, %v344
        %vm781 = vcmask 64512
        %v782 = vsel %vm781, %v765, %v403
        %v783 = vsel %vm781, %v766, %v405
        %v784 = vsel %vm781, %v767, %v407
        %v785 = vsel %vm781, %v768, %v409
        %v786 = vsel %vm781, %v769, %v411
        %v787 = vsel %vm781, %v770, %v413
        %v788 = vsel %vm781, %v771, %v415
        %v789 = vsel %vm781, %v772, %v417
        %v790 = vsel %vm781, %v773, %v419
        %v791 = vsel %vm781, %v774, %v421
        %v792 = vsel %vm781, %v775, %v423
        %v793 = vsel %vm781, %v776, %v425
        %v794 = vsel %vm781, %v777, %v427
        %v795 = vsel %vm781, %v778, %v429
        %v796 = vsel %vm781, %v779, %v431
        %v797 = vsel %vm781, %v780, %v433
        %vm798 = vcmask 97280
        %v799 = vsel %vm798, %v782, %v453
        %v800 = vsel %vm798, %v783, %v455
        %v801 = vsel %vm798, %v784, %v457
        %v802 = vsel %vm798, %v785, %v459
        %v803 = vsel %vm798, %v786, %v461
        %v804 = vsel %vm798, %v787, %v463
        %v805 = vsel %vm798, %v788, %v465
        %v806 = vsel %vm798, %v789, %v467
        %v807 = vsel %vm798, %v790, %v469
        %v808 = vsel %vm798, %v791, %v471
        %v809 = vsel %vm798, %v792, %v473
        %v810 = vsel %vm798, %v793, %v475
        %v811 = vsel %vm798, %v794, %v477
        %v812 = vsel %vm798, %v795, %v479
        %v813 = vsel %vm798, %v796, %v481
        %v814 = vsel %vm798, %v797, %v483
        %vm815 = vcmask 130048
        %v816 = vsel %vm815, %v799, %v507
        %v817 = vsel %vm815, %v800, %v509
        %v818 = vsel %vm815, %v801, %v511
        %v819 = vsel %vm815, %v802, %v513
        %v820 = vsel %vm815, %v803, %v515
        %v821 = vsel %vm815, %v804, %v517
        %v822 = vsel %vm815, %v805, %v519
        %v823 = vsel %vm815, %v806, %v521
        %v824 = vsel %vm815, %v807, %v523
        %v825 = vsel %vm815, %v808, %v525
        %v826 = vsel %vm815, %v809, %v527
        %v827 = vsel %vm815, %v810, %v529
        %v828 = vsel %vm815, %v811, %v531
        %v829 = vsel %vm815, %v812, %v533
        %v830 = vsel %vm815, %v813, %v535
        %v831 = vsel %vm815, %v814, %v537
        %vm832 = vcmask 162816
        %v833 = vsel %vm832, %v816, %v560
        %v834 = vsel %vm832, %v817, %v562
        %v835 = vsel %vm832, %v818, %v564
        %v836 = vsel %vm832, %v819, %v566
        %v837 = vsel %vm832, %v820, %v568
        %v838 = vsel %vm832, %v821, %v570
        %v839 = vsel %vm832, %v822, %v572
        %v840 = vsel %vm832, %v823, %v574
        %v841 = vsel %vm832, %v824, %v576
        %v842 = vsel %vm832, %v825, %v578
        %v843 = vsel %vm832, %v826, %v580
        %v844 = vsel %vm832, %v827, %v582
        %v845 = vsel %vm832, %v828, %v584
        %v846 = vsel %vm832, %v829, %v586
        %v847 = vsel %vm832, %v830, %v588
        %v848 = vsel %vm832, %v831, %v590
        %vm849 = vcmask 195584
        %v850 = vsel %vm849, %v833, %v610
        %v851 = vsel %vm849, %v834, %v612
        %v852 = vsel %vm849, %v835, %v614
        %v853 = vsel %vm849, %v836, %v616
        %v854 = vsel %vm849, %v837, %v618
        %v855 = vsel %vm849, %v838, %v620
        %v856 = vsel %vm849, %v839, %v622
        %v857 = vsel %vm849, %v840, %v624
        %v858 = vsel %vm849, %v841, %v626
        %v859 = vsel %vm849, %v842, %v628
        %v860 = vsel %vm849, %v843, %v630
        %v861 = vsel %vm849, %v844, %v632
        %v862 = vsel %vm849, %v845, %v634
        %v863 = vsel %vm849, %v846, %v636
        %v864 = vsel %vm849, %v847, %v638
        %v865 = vsel %vm849, %v848, %v640
        %vm866 = vcmask 228352
        %v867 = vsel %vm866, %v850, %v664
        %v868 = vsel %vm866, %v851, %v666
        %v869 = vsel %vm866, %v852, %v668
        %v870 = vsel %vm866, %v853, %v670
        %v871 = vsel %vm866, %v854, %v672
        %v872 = vsel %vm866, %v855, %v674
        %v873 = vsel %vm866, %v856, %v676
        %v874 = vsel %vm866, %v857, %v678
        %v875 = vsel %vm866, %v858, %v680
        %v876 = vsel %vm866, %v859, %v682
        %v877 = vsel %vm866, %v860, %v684
        %v878 = vsel %vm866, %v861, %v686
        %v879 = vsel %vm866, %v862, %v688
        %v880 = vsel %vm866, %v863, %v690
        %v881 = vsel %vm866, %v864, %v692
        %v882 = vsel %vm866, %v865, %v694
        %vm883 = vcmask 261120
        %v884 = vsel %vm883, %v867, %v717
        %v885 = vsel %vm883, %v868, %v719
        %v886 = vsel %vm883, %v869, %v721
        %v887 = vsel %vm883, %v870, %v723
        %v888 = vsel %vm883, %v871, %v725
        %v889 = vsel %vm883, %v872, %v727
        %v890 = vsel %vm883, %v873, %v729
        %v891 = vsel %vm883, %v874, %v731
        %v892 = vsel %vm883, %v875, %v733
        %v893 = vsel %vm883, %v876, %v735
        %v894 = vsel %vm883, %v877, %v737
        %v895 = vsel %vm883, %v878, %v739
        %v896 = vsel %vm883, %v879, %v741
        %v897 = vsel %vm883, %v880, %v743
        %v898 = vsel %vm883, %v881, %v745
        %v899 = vsel %vm883, %v882, %v747
        %v900 = vpack.c.bf16 %v885, %v884
        %v901 = vpack.c.bf16 %v887, %v886
        %v902 = vpack.c.bf16 %v889, %v888
        %v903 = vpack.c.bf16 %v891, %v890
        %v904 = vpack.c.bf16 %v893, %v892
        %v905 = vpack.c.bf16 %v895, %v894
        %v906 = vpack.c.bf16 %v897, %v896
        %v907 = vpack.c.bf16 %v899, %v898
        %v908 = vld [vmem:[%s1] sm:$0xf]
        %v909 = vld [vmem:[%s1 + $0x4] sm:$0xf]
        %v910 = vld [vmem:[%s1 + $0x8] sm:$0xf]
        %v911 = vld [vmem:[%s1 + $0xc] sm:$0xf]
        %v912 = vld [vmem:[%s1 + $0x10] sm:$0x3]
        %v913 = vld [vmem:[%s2] sm:$0x1]
        %v915 = vlaneseq
        %v916 = vshrl.u32 %v915, 7
        %v917 = vsub.s32 0, %v916
        %v918 = vrot.slane %v913, %v917
        %v925 = vunpack.c.l.b16 %v908
        %v926 = vunpack.c.l.b16 %v909
        %v927 = vunpack.c.l.b16 %v910
        %v928 = vunpack.c.l.b16 %v911
        %v929 = vunpack.c.l.b16 %v912
        %v930 = vpack.c.b16 %v926, %v925
        %v931 = vpack.c.b16 %v928, %v927
        %v932 = vpack.c.b16 %v929, %v929
        %vm935 = vcmask 293888
        %v937 = vsel %vm935, %v900, 0
        %v940 = vsel %vm935, %v901, 0
        %v943 = vsel %vm935, %v902, 0
        %v946 = vsel %vm935, %v903, 0
        %v949 = vsel %vm935, %v904, 0
        %v952 = vsel %vm935, %v905, 0
        %v955 = vsel %vm935, %v906, 0
        %v958 = vsel %vm935, %v907, 0
        %vm960 = vcmask 1041408
        %v962 = vsel %vm960, %v932, 0
        %964 = vmatprep.subr.bf16.mxu0 0
        %965 = vmatpush1.bf16.msra.mxu0 %v930
        %966 = vmatprep.subr.bf16.mxu0 0
        %967 = vmatpush1.bf16.msra.mxu0 %v931
        %968 = vmatprep.subr.bf16.mxu0 0
        %969 = vmatpush1.bf16.msra.mxu0 %v962
        %970 = vmatprep.subr.bf16.mxu0 0
        %971 = vmatpush1.bf16.msra.mxu0 0
        %972 = vmatprep.subr.bf16.mxu0 0
        %973 = vmatpush1.bf16.msra.mxu0 0
        %974 = vmatprep.subr.bf16.mxu0 0
        %975 = vmatpush1.bf16.msra.mxu0 0
        %976 = vmatprep.subr.bf16.mxu0 0
        %977 = vmatpush1.bf16.msra.mxu0 0
        %978 = vmatprep.subr.bf16.mxu0 0
        %979 = vmatpush1.bf16.msra.mxu0 0
        %980 = vmatprep.subr.bf16.mxu0 0
        %981 = vmatpush1.bf16.msra.mxu0 0
        %982 = vmatprep.subr.bf16.mxu0 0
        %983 = vmatpush1.bf16.msra.mxu0 0
        %984 = vmatprep.subr.bf16.mxu0 0
        %985 = vmatpush1.bf16.msra.mxu0 0
        %986 = vmatprep.subr.bf16.mxu0 0
        %987 = vmatpush1.bf16.msra.mxu0 0
        %988 = vmatprep.subr.bf16.mxu0 0
        %989 = vmatpush1.bf16.msra.mxu0 0
        %990 = vmatprep.subr.bf16.mxu0 0
        %991 = vmatpush1.bf16.msra.mxu0 0
        %992 = vmatprep.subr.bf16.mxu0 0
        %993 = vmatpush1.bf16.msra.mxu0 0
        %994 = vmatprep.subr.bf16.mxu0 0
        %995 = vmatpush1.bf16.msra.mxu0 0
        %996 = vmatprep.mubr.bf16.mxu0 0
        %997 = vmatmul.mubr.bf16.gmra.mrb[0].mxu0 %v937
        %v998 = vpop.f32.mrb[0].mxu0
        %v999 = vadd.f32 %v918, %v998
        %v1000 = vpop.f32.mrb[0].mxu0
        %v1001 = vpop.f32.mrb[0].mxu0
        %v1002 = vadd.f32 %v918, %v1001
        %v1003 = vpop.f32.mrb[0].mxu0
        %1004 = vmatprep.mubr.bf16.mxu0 0
        %1005 = vmatmul.mubr.bf16.gmra.mrb[0].mxu0 %v940
        %v1006 = vpop.f32.mrb[0].mxu0
        %v1007 = vadd.f32 %v918, %v1006
        %v1008 = vpop.f32.mrb[0].mxu0
        %v1009 = vpop.f32.mrb[0].mxu0
        %v1010 = vadd.f32 %v918, %v1009
        %v1011 = vpop.f32.mrb[0].mxu0
        %1012 = vmatprep.mubr.bf16.mxu0 0
        %1013 = vmatmul.mubr.bf16.gmra.mrb[0].mxu0 %v943
        %v1014 = vpop.f32.mrb[0].mxu0
        %v1015 = vadd.f32 %v918, %v1014
        %v1016 = vpop.f32.mrb[0].mxu0
        %v1017 = vpop.f32.mrb[0].mxu0
        %v1018 = vadd.f32 %v918, %v1017
        %v1019 = vpop.f32.mrb[0].mxu0
        %1020 = vmatprep.mubr.bf16.mxu0 0
        %1021 = vmatmul.mubr.bf16.gmra.mrb[0].mxu0 %v946
        %v1022 = vpop.f32.mrb[0].mxu0
        %v1023 = vadd.f32 %v918, %v1022
        %v1024 = vpop.f32.mrb[0].mxu0
        %v1025 = vpop.f32.mrb[0].mxu0
        %v1026 = vadd.f32 %v918, %v1025
        %v1027 = vpop.f32.mrb[0].mxu0
        %1028 = vmatprep.mubr.bf16.mxu0 0
        %1029 = vmatmul.mubr.bf16.gmra.mrb[0].mxu0 %v949
        %v1030 = vpop.f32.mrb[0].mxu0
        %v1031 = vadd.f32 %v918, %v1030
        %v1032 = vpop.f32.mrb[0].mxu0
        %v1033 = vpop.f32.mrb[0].mxu0
        %v1034 = vadd.f32 %v918, %v1033
        %v1035 = vpop.f32.mrb[0].mxu0
        %1036 = vmatprep.mubr.bf16.mxu0 0
        %1037 = vmatmul.mubr.bf16.gmra.mrb[0].mxu0 %v952
        %v1038 = vpop.f32.mrb[0].mxu0
        %v1039 = vadd.f32 %v918, %v1038
        %v1040 = vpop.f32.mrb[0].mxu0
        %v1041 = vpop.f32.mrb[0].mxu0
        %v1042 = vadd.f32 %v918, %v1041
        %v1043 = vpop.f32.mrb[0].mxu0
        %1044 = vmatprep.mubr.bf16.mxu0 0
        %1045 = vmatmul.mubr.bf16.gmra.mrb[0].mxu0 %v955
        %v1046 = vpop.f32.mrb[0].mxu0
        %v1047 = vadd.f32 %v918, %v1046
        %v1048 = vpop.f32.mrb[0].mxu0
        %v1049 = vpop.f32.mrb[0].mxu0
        %v1050 = vadd.f32 %v918, %v1049
        %v1051 = vpop.f32.mrb[0].mxu0
        %1052 = vmatprep.mubr.bf16.mxu0 0
        %1053 = vmatmul.mubr.bf16.gmra.mrb[0].mxu0 %v958
        %v1054 = vpop.f32.mrb[0].mxu0
        %v1055 = vadd.f32 %v918, %v1054
        %v1056 = vpop.f32.mrb[0].mxu0
        %v1057 = vpop.f32.mrb[0].mxu0
        %v1058 = vadd.f32 %v918, %v1057
        %v1059 = vpop.f32.mrb[0].mxu0
        %1060 = vdwg.mxu0
        %1061 = vst.msk [vmem:[%s177] sm:$0xff] %vm883, %v999
        %1062 = vst.msk [vmem:[%s177 + $0x8] sm:$0xff] %vm883, %v1002
        %1063 = vst.msk [vmem:[%s177 + $0x10] sm:$0xff] %vm883, %v1007
        %1064 = vst.msk [vmem:[%s177 + $0x18] sm:$0xff] %vm883, %v1010
        %1065 = vst.msk [vmem:[%s177 + $0x20] sm:$0xff] %vm883, %v1015
        %1066 = vst.msk [vmem:[%s177 + $0x28] sm:$0xff] %vm883, %v1018
        %1067 = vst.msk [vmem:[%s177 + $0x30] sm:$0xff] %vm883, %v1023
        %1068 = vst.msk [vmem:[%s177 + $0x38] sm:$0xff] %vm883, %v1026
        %1069 = vst.msk [vmem:[%s177 + $0x40] sm:$0xff] %vm883, %v1031
        %1070 = vst.msk [vmem:[%s177 + $0x48] sm:$0xff] %vm883, %v1034
        %1071 = vst.msk [vmem:[%s177 + $0x50] sm:$0xff] %vm883, %v1039
        %1072 = vst.msk [vmem:[%s177 + $0x58] sm:$0xff] %vm883, %v1042
        %1073 = vst.msk [vmem:[%s177 + $0x60] sm:$0xff] %vm883, %v1047
        %1074 = vst.msk [vmem:[%s177 + $0x68] sm:$0xff] %vm883, %v1050
        %1075 = vst.msk [vmem:[%s177 + $0x70] sm:$0xff] %vm883, %v1055
        %1076 = vst.msk [vmem:[%s177 + $0x78] sm:$0xff] %vm883, %v1058
        %s1077 = sand.u32 %s107, 1
        %s1078 = scalar_lea.sflag [#allocation3], %s1077
        %s1079 = sand.u32 %s107, 1
        %s1080 = smul.addr %s1079, 128
        %s1081 = scalar_lea.vmem [#allocation2], %s1080
        // Predicated region
        $region33: #{tpu_custom_call.1} parent=31 // pred_check
          %p1082 = pneg %p117
        $region34: #{tpu_custom_call.1} parent=31 // pred_check_branch
          %1084 = sbr.rel (%p1082) target = $region36
        $region35: #{tpu_custom_call.1} parent=31 // pred_region
          %s1085 = smul.u32 8, %s22
          %s1087 = ssub.s32 2048, 2048
          %1088 = vsyncadd %s1078, %s1087
          %s1089 = smul.addr %s1085, 2
          %s1090 = smul.addr %s21, 32
          %s1091 = sadd.s32 %s1089, %s1090
          %s1092 = smul.addr %s1091, 128
          %s1093 = scalar_lea.hbm %s3, %s1092
          %s1094 = sshll.u32 %s1081, 4
          %s1095 = int_to_ptr.vmem [resolvable:$true] %s1094
          %1100 = dma.vmem_to_hbm [thread:$0]  %s1095, 2048, %s1093, %s1078, 128, 128, 8
        $region36: #{tpu_custom_call.1} parent=31 // pred_fallthru
          _
      $region32: #{tpu_custom_call.1} parent=5 // pred_fallthru
        _
      %p1101 = scmp.le.s32.totalorder 2, %s12
      // Predicated region
      $region37: #{tpu_custom_call.1} parent=5 // pred_check
        %p1102 = pneg %p1101
      $region38: #{tpu_custom_call.1} parent=5 // pred_check_branch
        %1104 = sbr.rel (%p1102) target = $region40
      $region39: #{tpu_custom_call.1} parent=5 // pred_region
        %s1105 = ssub.s32 %s12, 2
        // Predicated region
        $region41: #{tpu_custom_call.1} parent=39 // pred_check
          %p1106 = pneg %p123
        $region42: #{tpu_custom_call.1} parent=39 // pred_check_branch
          %1108 = sbr.rel (%p1106) target = $region44
        $region43: #{tpu_custom_call.1} parent=39 // pred_region
          %s1109 = sand.u32 %s108, 1
          %s1110 = scalar_lea.sflag [#allocation3], %s1109
          %s1111 = sand.u32 %s108, 1
          %s1112 = smul.addr %s1111, 128
          %s1113 = scalar_lea.vmem [#allocation2], %s1112
          %1114 = dma.done %s1110, 2048
        $region44: #{tpu_custom_call.1} parent=39 // pred_fallthru
          _
      $region40: #{tpu_custom_call.1} parent=5 // pred_fallthru
        _
    $region6: #{tpu_custom_call.1} parent=1 // loop_footer
      %s16 = sadd.s32 1, %s12
    $region7: #{tpu_custom_call.1} parent=1 // loop_footer_branch
      %11 = sbr.rel target = $region3
    $region8: #{tpu_custom_call.1} parent=1 // loop_exit
      _
    %1115 = vsyncpa [#allocation3], 1
    %s1116 = scalar_lea.sflag [#allocation3], 1
    %1117 = vsyncpa %s1116, 1

</llo_original>
